<compile_context>
chip_gen: v7x
topology: tpu7x:2x2x1
jax: 0.10.0
libtpu: 0.0.40
codegen_flags: <defaults>
</compile_context>

<pallas_src>
import functools

import jax
import jax.numpy as jnp
from jax import lax
from jax.experimental import pallas as pl
from jax.experimental.pallas import tpu as pltpu


def _mlp_kernel(x_ref, w1_ref, b1_ref, w2_ref, b2_ref, o_ref, *, transposed_out):
    # x:  (TB, D_in)   w1: (H, D_in)   b1: (H, 1)   w2: (D_out, H)
    # b2: (1, D_out) [row-major out] or (D_out, 1) [channels-first out]
    # o:  (TB, D_out) or (D_out, TB)
    x = x_ref[...].astype(w1_ref.dtype)  # in-kernel cast (no-op for f32)

    # Hidden layer: h_T = w1 @ x.T  (contract D_in) -> (H, TB).
    # Batch on the lane axis -> lane-dense bias + ReLU; f32 accumulation.
    h = lax.dot_general(w1_ref[...], x, (((1,), (1,)), ((), ())),
                        preferred_element_type=jnp.float32)
    h = jnp.maximum(h + b1_ref[...], 0.0)                     # (H, TB) f32
    h = h.astype(w2_ref.dtype)

    if transposed_out:
        # o_T = w2 @ h_T  -> (D_out, TB): fully lane-dense store.
        o = lax.dot_general(w2_ref[...], h, (((1,), (0,)), ((), ())),
                            preferred_element_type=jnp.float32)
    else:
        # o = h_T.T @ w2.T -> (TB, D_out): row-major store, no wrapper .T.
        o = lax.dot_general(h, w2_ref[...], (((0,), (1,)), ((), ())),
                            preferred_element_type=jnp.float32)
    o_ref[...] = (o + b2_ref[...]).astype(o_ref.dtype)


def simple_nn_forward(x, w1, b1, w2, b2, *, compute_dtype=None,
                      block_batch=8192, channels_first_output=False,
                      vmem_limit_bytes=None):
    """Fused MLP forward (torch semantics: relu(x @ w1.T + b1) @ w2.T + b2).

    x:  (B, D_in) row-major activations.
    w1: (H, D_in), b1: (H,), w2: (D_out, H), b2: (D_out,)  (torch Linear layout).

    Returns (B, D_out) in x.dtype, or (D_out, B) if channels_first_output.

    compute_dtype: e.g. jnp.bfloat16 for the MXU fast path; only the tiny
      weights are cast in the wrapper, the x tile is cast in-kernel.
    block_batch: batch tile.  8K default; sweep 8K-32K at large B (keep the
      double-buffered tiles inside v5e's 16 MiB scoped VMEM; on v7x pick it so
      cdiv(B, block_batch) >= 2 to give both TensorCores work).
    """
    B, D_in = x.shape
    H = w1.shape[0]
    D_out = w2.shape[0]
    out_dtype = x.dtype

    if compute_dtype is not None:
        w1 = w1.astype(compute_dtype)   # tiny: cheap wrapper-side cast
        w2 = w2.astype(compute_dtype)

    # Batch tile: multiple of 8 sublanes; last block may be partial (Pallas
    # drops OOB writes). No host-side padding or slicing.
    TB = max(8, min(block_batch, pl.cdiv(B, 8) * 8))
    if channels_first_output and TB != B and TB % 128 != 0:
        TB = pl.cdiv(TB, 128) * 128     # lane-dim block must be 128-aligned
    num_blocks = pl.cdiv(B, TB)

    # Biases in f32, shaped to broadcast against the chosen output layout.
    b1c = b1.reshape(H, 1).astype(jnp.float32)
    if channels_first_output:
        b2c = b2.reshape(D_out, 1).astype(jnp.float32)
        out_shape = jax.ShapeDtypeStruct((D_out, B), out_dtype)
        out_spec = pl.BlockSpec((D_out, TB), lambda i: (0, i))
    else:
        b2c = b2.reshape(1, D_out).astype(jnp.float32)
        out_shape = jax.ShapeDtypeStruct((B, D_out), out_dtype)
        out_spec = pl.BlockSpec((TB, D_out), lambda i: (i, 0))

    itemsize = jnp.dtype(x.dtype).itemsize
    cost = pl.CostEstimate(
        flops=2 * B * (D_in * H + H * D_out),
        transcendentals=0,
        bytes_accessed=(B * D_in * itemsize
                        + B * D_out * jnp.dtype(out_dtype).itemsize
                        + w1.size * jnp.dtype(w1.dtype).itemsize
                        + w2.size * jnp.dtype(w2.dtype).itemsize
                        + (H + D_out) * 4))

    kernel = functools.partial(_mlp_kernel,
                               transposed_out=channels_first_output)

    return pl.pallas_call(
        kernel,
        out_shape=out_shape,
        grid=(num_blocks,),
        in_specs=[
            pl.BlockSpec((TB, D_in), lambda i: (i, 0)),    # x streams row-major
            pl.BlockSpec((H, D_in), lambda i: (0, 0)),     # weights/biases stay
            pl.BlockSpec((H, 1), lambda i: (0, 0)),        # VMEM-resident
            pl.BlockSpec((D_out, H), lambda i: (0, 0)),
            pl.BlockSpec(b2c.shape, lambda i: (0, 0)),
        ],
        out_specs=out_spec,
        compiler_params=pltpu.CompilerParams(
            dimension_semantics=("parallel",),             # batch: no carry
            vmem_limit_bytes=vmem_limit_bytes),
        cost_estimate=cost,
    )(x, w1, b1c, w2, b2c)


def reference_forward(x, w1, b1, w2, b2):
    # torch semantics: Linear(x) = x @ W.T + b
    h = jnp.maximum(x @ w1.T + b1, 0.0)
    return h @ w2.T + b2


if __name__ == "__main__":
    # Shapes implied by the module: input_dim=32, hidden_dim=64, output_dim=16.
    B, D_in, H, D_out = 8, 32, 64, 16

    key = jax.random.PRNGKey(0)
    kx, kw1, kb1, kw2, kb2, kx2, kx3 = jax.random.split(key, 7)

    x = jax.random.normal(kx, (B, D_in), dtype=jnp.float32)

    # torch.nn.Linear-style init, weights kept in torch (out, in) layout.
    bound1 = 1.0 / jnp.sqrt(jnp.float32(D_in))
    w1 = jax.random.uniform(kw1, (H, D_in), jnp.float32, -bound1, bound1)
    b1 = jax.random.uniform(kb1, (H,), jnp.float32, -bound1, bound1)

    bound2 = 1.0 / jnp.sqrt(jnp.float32(H))
    w2 = jax.random.uniform(kw2, (D_out, H), jnp.float32, -bound2, bound2)
    b2 = jax.random.uniform(kb2, (D_out,), jnp.float32, -bound2, bound2)

    # 1) Small single-tile run (TB == B == 8).
    out = simple_nn_forward(x, w1, b1, w2, b2)
    jax.block_until_ready(out)
    ref = reference_forward(x, w1, b1, w2, b2)
    assert out.shape == (B, D_out)
    assert jnp.allclose(out, ref, atol=1e-5, rtol=1e-5)

    # 2) Multi-tile run with a PARTIAL last block (B=200, TB=128 -> grid=(2,)),
    #    exercising the no-pad path (OOB writes dropped).
    B2 = 200
    x2 = jax.random.normal(kx2, (B2, D_in), dtype=jnp.float32)
    out2 = simple_nn_forward(x2, w1, b1, w2, b2, block_batch=128)
    jax.block_until_ready(out2)
    ref2 = reference_forward(x2, w1, b1, w2, b2)
    assert out2.shape == (B2, D_out)
    assert jnp.allclose(out2, ref2, atol=1e-5, rtol=1e-5)

    # 3) bf16 MXU path (weights cast in wrapper, x tile cast in-kernel),
    #    checked at a loose tolerance.
    out2_bf16 = simple_nn_forward(x2, w1, b1, w2, b2, block_batch=128,
                                  compute_dtype=jnp.bfloat16)
    jax.block_until_ready(out2_bf16)
    assert out2_bf16.shape == (B2, D_out)
    assert jnp.allclose(out2_bf16, ref2, atol=5e-2, rtol=5e-2)

    # 4) Channels-first (D_out, B) lane-dense output path (B=256, TB=128).
    B3 = 256
    x3 = jax.random.normal(kx3, (B3, D_in), dtype=jnp.float32)
    out3 = simple_nn_forward(x3, w1, b1, w2, b2, block_batch=128,
                             channels_first_output=True)
    jax.block_until_ready(out3)
    ref3 = reference_forward(x3, w1, b1, w2, b2)
    assert out3.shape == (D_out, B3)
    assert jnp.allclose(out3, ref3.T, atol=1e-5, rtol=1e-5)

    print("KERNEL_OK")
</pallas_src>

<mosaic_0001>
module attributes {stable_mosaic.version = 11 : i64} {
  func.func @_mlp_kernel(%arg0: i32, %arg1: memref<8x32xf32, #tpu.memory_space<vmem>>, %arg2: memref<64x32xf32, #tpu.memory_space<vmem>>, %arg3: memref<64x1xf32, #tpu.memory_space<vmem>>, %arg4: memref<16x64xf32, #tpu.memory_space<vmem>>, %arg5: memref<1x16xf32, #tpu.memory_space<vmem>>, %arg6: memref<8x16xf32, #tpu.memory_space<vmem>>) attributes {dimension_semantics = [#tpu.dimension_semantics<parallel>], iteration_bounds = array<i64: 1>, scalar_prefetch = 0 : i64, scratch_operands = 0 : i64, tpu.core_type = #tpu.core_type<tc>, window_params = [{transform_indices = @transform_0, window_bounds = array<i64: 8, 32>}, {pipeline_mode = #tpu.pipeline_mode<synchronous>, transform_indices = @transform_1, window_bounds = array<i64: 64, 32>}, {pipeline_mode = #tpu.pipeline_mode<synchronous>, transform_indices = @transform_2, window_bounds = array<i64: 64, 1>}, {pipeline_mode = #tpu.pipeline_mode<synchronous>, transform_indices = @transform_3, window_bounds = array<i64: 16, 64>}, {pipeline_mode = #tpu.pipeline_mode<synchronous>, transform_indices = @transform_4, window_bounds = array<i64: 1, 16>}, {transform_indices = @transform_5, window_bounds = array<i64: 8, 16>}]} {
    %c0 = arith.constant 0 : index
    %c0_0 = arith.constant 0 : index
    %0 = vector.load %arg1[%c0, %c0_0] : memref<8x32xf32, #tpu.memory_space<vmem>>, vector<8x32xf32>
    %c0_1 = arith.constant 0 : index
    %c0_2 = arith.constant 0 : index
    %1 = vector.load %arg2[%c0_1, %c0_2] : memref<64x32xf32, #tpu.memory_space<vmem>>, vector<64x32xf32>
    %cst = arith.constant dense<0.000000e+00> : vector<64x8xf32>
    %2 = tpu.matmul %1, %0, %cst {dimension_numbers = #tpu.dot_dimension_numbers<[1], [1], [0], [0], [0, 0, 1, 0], [], []>} : vector<64x32xf32>, vector<8x32xf32>, vector<64x8xf32> -> vector<64x8xf32>
    %c0_3 = arith.constant 0 : index
    %c0_4 = arith.constant 0 : index
    %3 = vector.load %arg3[%c0_3, %c0_4] : memref<64x1xf32, #tpu.memory_space<vmem>>, vector<64x1xf32>
    %4 = vector.broadcast %3 : vector<64x1xf32> to vector<64x8xf32>
    %5 = arith.addf %2, %4 : vector<64x8xf32>
    %cst_5 = arith.constant 0.000000e+00 : f32
    %6 = vector.broadcast %cst_5 : f32 to vector<64x8xf32>
    %7 = arith.maximumf %5, %6 : vector<64x8xf32>
    %c0_6 = arith.constant 0 : index
    %c0_7 = arith.constant 0 : index
    %8 = vector.load %arg4[%c0_6, %c0_7] : memref<16x64xf32, #tpu.memory_space<vmem>>, vector<16x64xf32>
    %cst_8 = arith.constant dense<0.000000e+00> : vector<8x16xf32>
    %9 = tpu.matmul %7, %8, %cst_8 {dimension_numbers = #tpu.dot_dimension_numbers<[0], [1], [1], [0], [0, 1, 1, 0], [], []>} : vector<64x8xf32>, vector<16x64xf32>, vector<8x16xf32> -> vector<8x16xf32>
    %c0_9 = arith.constant 0 : index
    %c0_10 = arith.constant 0 : index
    %10 = vector.load %arg5[%c0_9, %c0_10] : memref<1x16xf32, #tpu.memory_space<vmem>>, vector<1x16xf32>
    %11 = vector.broadcast %10 : vector<1x16xf32> to vector<8x16xf32>
    %12 = arith.addf %9, %11 : vector<8x16xf32>
    %c0_11 = arith.constant 0 : index
    %c0_12 = arith.constant 0 : index
    %13 = vector.load %arg6[%c0_11, %c0_12] : memref<8x16xf32, #tpu.memory_space<vmem>>, vector<8x16xf32>
    tpu.vector_store %arg6[%c0_11, %c0_12], %12 {strides = array<i32>} : memref<8x16xf32, #tpu.memory_space<vmem>>, vector<8x16xf32>,
    return
  }
  func.func @transform_0(%arg0: i32) -> (i32, i32) {
    %c0_i32 = arith.constant 0 : i32
    %c0_i32_0 = arith.constant 0 : i32
    return %arg0, %c0_i32 : i32, i32
  }
  func.func @transform_1(%arg0: i32) -> (i32, i32) {
    %c0_i32 = arith.constant 0 : i32
    %c0_i32_0 = arith.constant 0 : i32
    %c0_i32_1 = arith.constant 0 : i32
    return %c0_i32, %c0_i32_0 : i32, i32
  }
  func.func @transform_2(%arg0: i32) -> (i32, i32) {
    %c0_i32 = arith.constant 0 : i32
    %c0_i32_0 = arith.constant 0 : i32
    %c0_i32_1 = arith.constant 0 : i32
    return %c0_i32, %c0_i32_0 : i32, i32
  }
  func.func @transform_3(%arg0: i32) -> (i32, i32) {
    %c0_i32 = arith.constant 0 : i32
    %c0_i32_0 = arith.constant 0 : i32
    %c0_i32_1 = arith.constant 0 : i32
    return %c0_i32, %c0_i32_0 : i32, i32
  }
  func.func @transform_4(%arg0: i32) -> (i32, i32) {
    %c0_i32 = arith.constant 0 : i32
    %c0_i32_0 = arith.constant 0 : i32
    %c0_i32_1 = arith.constant 0 : i32
    return %c0_i32, %c0_i32_0 : i32, i32
  }
  func.func @transform_5(%arg0: i32) -> (i32, i32) {
    %c0_i32 = arith.constant 0 : i32
    %c0_i32_0 = arith.constant 0 : i32
    return %arg0, %c0_i32 : i32, i32
  }
}

</mosaic_0001>

<llo_original>
// kernel: tpu_custom_call.1
$region0: #{tpu_custom_call.1}
  #allocation0 [shape = 'u32[]', space=smem, size = 0x4, offset = 0x4, fixed_abs, tag = 'smem constant byte address 0x4 - core index']
  #allocation1 [shape = 'u32[144,128]{1,0:T(1,128)}', space=vmem, size = 0x12000, scoped, tag = 'internal scratch']
  %s0 = inlined_call_operand.vmem [shape: f32[8,32], index: 0, kind: input, shape index: {}]
  %s1 = inlined_call_operand.vmem [shape: f32[64,32], index: 1, kind: input, shape index: {}]
  %s2 = inlined_call_operand.vmem [shape: f32[64,1], index: 2, kind: input, shape index: {}]
  %s3 = inlined_call_operand.vmem [shape: f32[16,64], index: 3, kind: input, shape index: {}]
  %s4 = inlined_call_operand.vmem [shape: f32[1,16], index: 4, kind: input, shape index: {}]
  %s5 = inlined_call_operand.hbm [shape: f32[8,16], index: 5, kind: output, shape index: {}]
  %s6 = sld [smem:[#allocation0]]
  $region30: #{tpu_custom_call.1} parent=0
    _
  %s8 = ssub.s32 1, %s6
  %s9 = scalar_select 0, %s8, %s6
  $region1: #{tpu_custom_call.1} parent=0
    #allocation2 [shape = 'u8[4096]{0}', space=vmem, size = 0x1000, scoped, tag = 'output window, operand 0, single buffered']
    #allocation3 [shape = 's32[1]{0}', space=sflag, size = 0x4, scoped, tag = 'scoped memory for tpu_custom_call.1']
    %10 = vsyncpa [#allocation3], 0
    // Predicated region
    $region2: #{tpu_custom_call.1} parent=1 // pred_check
      _
    $region3: #{tpu_custom_call.1} parent=1 // pred_check_branch
      %12 = sbr.rel (0) target = $region5
    $region4: #{tpu_custom_call.1} parent=1 // pred_region
      _
    $region5: #{tpu_custom_call.1} parent=1 // pred_fallthru
      _
    // Predicated region
    $region6: #{tpu_custom_call.1} parent=1 // pred_check
      _
    $region7: #{tpu_custom_call.1} parent=1 // pred_check_branch
      %14 = sbr.rel (0) target = $region9
    $region8: #{tpu_custom_call.1} parent=1 // pred_region
      _
    $region9: #{tpu_custom_call.1} parent=1 // pred_fallthru
      _
    // Predicated region
    $region10: #{tpu_custom_call.1} parent=1 // pred_check
      _
    $region11: #{tpu_custom_call.1} parent=1 // pred_check_branch
      %16 = sbr.rel (0) target = $region13
    $region12: #{tpu_custom_call.1} parent=1 // pred_region
      _
    $region13: #{tpu_custom_call.1} parent=1 // pred_fallthru
      _
    // Predicated region
    $region14: #{tpu_custom_call.1} parent=1 // pred_check
      _
    $region15: #{tpu_custom_call.1} parent=1 // pred_check_branch
      %18 = sbr.rel (0) target = $region17
    $region16: #{tpu_custom_call.1} parent=1 // pred_region
      _
    $region17: #{tpu_custom_call.1} parent=1 // pred_fallthru
      _
    // Predicated region
    $region18: #{tpu_custom_call.1} parent=1 // pred_check
      _
    $region19: #{tpu_custom_call.1} parent=1 // pred_check_branch
      %20 = sbr.rel (0) target = $region21
    $region20: #{tpu_custom_call.1} parent=1 // pred_region
      _
    $region21: #{tpu_custom_call.1} parent=1 // pred_fallthru
      _
    %v21 = vld [vmem:[%s0] sm:$0xff]
    %v22 = vld [vmem:[%s1] sm:$0xff]
    %v23 = vld [vmem:[%s1 + $0x8] sm:$0xff]
    %v24 = vld [vmem:[%s1 + $0x10] sm:$0xff]
    %v25 = vld [vmem:[%s1 + $0x18] sm:$0xff]
    %v26 = vld [vmem:[%s1 + $0x20] sm:$0xff]
    %v27 = vld [vmem:[%s1 + $0x28] sm:$0xff]
    %v28 = vld [vmem:[%s1 + $0x30] sm:$0xff]
    %v29 = vld [vmem:[%s1 + $0x38] sm:$0xff]
    %v30 = vld [vmem:[%s2] sm:$0xff]
    %v31 = vld [vmem:[%s2 + $0x8] sm:$0xff]
    %v32 = vld [vmem:[%s2 + $0x10] sm:$0xff]
    %v33 = vld [vmem:[%s2 + $0x18] sm:$0xff]
    %v34 = vld [vmem:[%s2 + $0x20] sm:$0xff]
    %v35 = vld [vmem:[%s2 + $0x28] sm:$0xff]
    %v36 = vld [vmem:[%s2 + $0x30] sm:$0xff]
    %v37 = vld [vmem:[%s2 + $0x38] sm:$0xff]
    %39 = vset.pattern.permute.xlu0 0
    %40 = vperm.xlu0 %39, %v30
    %v41 = vpop.permute.xlu0 %40
    %44 = vset.pattern.permute.xlu0 0
    %45 = vperm.xlu0 %44, %v31
    %v46 = vpop.permute.xlu0 %45
    %49 = vset.pattern.permute.xlu0 0
    %50 = vperm.xlu0 %49, %v32
    %v51 = vpop.permute.xlu0 %50
    %54 = vset.pattern.permute.xlu0 0
    %55 = vperm.xlu0 %54, %v33
    %v56 = vpop.permute.xlu0 %55
    %59 = vset.pattern.permute.xlu0 0
    %60 = vperm.xlu0 %59, %v34
    %v61 = vpop.permute.xlu0 %60
    %64 = vset.pattern.permute.xlu0 0
    %65 = vperm.xlu0 %64, %v35
    %v66 = vpop.permute.xlu0 %65
    %69 = vset.pattern.permute.xlu0 0
    %70 = vperm.xlu0 %69, %v36
    %v71 = vpop.permute.xlu0 %70
    %74 = vset.pattern.permute.xlu0 0
    %75 = vperm.xlu0 %74, %v37
    %v76 = vpop.permute.xlu0 %75
    %vm78 = vcmask 261120
    %v80 = vsel %vm78, %v22, 0
    %v83 = vsel %vm78, %v23, 0
    %v86 = vsel %vm78, %v24, 0
    %v89 = vsel %vm78, %v25, 0
    %v92 = vsel %vm78, %v26, 0
    %v95 = vsel %vm78, %v27, 0
    %v98 = vsel %vm78, %v28, 0
    %v101 = vsel %vm78, %v29, 0
    %v104 = vsel %vm78, %v21, 0
    %106 = vmatprep.subr.mxu0 0.0
    %107 = vmatpush1.xpose.msra.mxu0 %v104
    %108 = vmatprep.subr.mxu0 0.0
    %109 = vmatpush1.xpose.msra.mxu0 0.0
    %110 = vmatprep.subr.mxu0 0.0
    %111 = vmatpush1.xpose.msra.mxu0 0.0
    %112 = vmatprep.subr.mxu0 0.0
    %113 = vmatpush1.xpose.msra.mxu0 0.0
    %114 = vmatprep.subr.mxu0 0.0
    %115 = vmatpush1.xpose.msra.mxu0 0.0
    %116 = vmatprep.subr.mxu0 0.0
    %117 = vmatpush1.xpose.msra.mxu0 0.0
    %118 = vmatprep.subr.mxu0 0.0
    %119 = vmatpush1.xpose.msra.mxu0 0.0
    %120 = vmatprep.subr.mxu0 0.0
    %121 = vmatpush1.xpose.msra.mxu0 0.0
    %122 = vmatprep.subr.mxu0 0.0
    %123 = vmatpush1.xpose.msra.mxu0 0.0
    %124 = vmatprep.subr.mxu0 0.0
    %125 = vmatpush1.xpose.msra.mxu0 0.0
    %126 = vmatprep.subr.mxu0 0.0
    %127 = vmatpush1.xpose.msra.mxu0 0.0
    %128 = vmatprep.subr.mxu0 0.0
    %129 = vmatpush1.xpose.msra.mxu0 0.0
    %130 = vmatprep.subr.mxu0 0.0
    %131 = vmatpush1.xpose.msra.mxu0 0.0
    %132 = vmatprep.subr.mxu0 0.0
    %133 = vmatpush1.xpose.msra.mxu0 0.0
    %134 = vmatprep.subr.mxu0 0.0
    %135 = vmatpush1.xpose.msra.mxu0 0.0
    %136 = vmatprep.subr.mxu0 0.0
    %137 = vmatpush1.xpose.msra.mxu0 0.0
    %138 = vmatprep.subr.mxu0 0.0
    %139 = vmatpush1.xpose.msra.mxu0 0.0
    %140 = vmatprep.subr.mxu0 0.0
    %141 = vmatpush1.xpose.msra.mxu0 0.0
    %142 = vmatprep.subr.mxu0 0.0
    %143 = vmatpush1.xpose.msra.mxu0 0.0
    %144 = vmatprep.subr.mxu0 0.0
    %145 = vmatpush1.xpose.msra.mxu0 0.0
    %146 = vmatprep.subr.mxu0 0.0
    %147 = vmatpush1.xpose.msra.mxu0 0.0
    %148 = vmatprep.subr.mxu0 0.0
    %149 = vmatpush1.xpose.msra.mxu0 0.0
    %150 = vmatprep.subr.mxu0 0.0
    %151 = vmatpush1.xpose.msra.mxu0 0.0
    %152 = vmatprep.subr.mxu0 0.0
    %153 = vmatpush1.xpose.msra.mxu0 0.0
    %154 = vmatprep.subr.mxu0 0.0
    %155 = vmatpush1.xpose.msra.mxu0 0.0
    %156 = vmatprep.subr.mxu0 0.0
    %157 = vmatpush1.xpose.msra.mxu0 0.0
    %158 = vmatprep.subr.mxu0 0.0
    %159 = vmatpush1.xpose.msra.mxu0 0.0
    %160 = vmatprep.subr.mxu0 0.0
    %161 = vmatpush1.xpose.msra.mxu0 0.0
    %162 = vmatprep.subr.mxu0 0.0
    %163 = vmatpush1.xpose.msra.mxu0 0.0
    %164 = vmatprep.subr.mxu0 0.0
    %165 = vmatpush1.xpose.msra.mxu0 0.0
    %166 = vmatprep.subr.mxu0 0.0
    %167 = vmatpush1.xpose.msra.mxu0 0.0
    %168 = vmatprep.subr.mxu0 0.0
    %169 = vmatpush1.xpose.msra.mxu0 0.0
    %170 = vmatprep.mubr.f32.mxu0 0.0
    %171 = vmatmul.mubr.f32.gmra.mrb[0].mxu0 %v80
    %v172 = vpop.f32.mrb[0].mxu0
    %v173 = vadd.f32 %v41, %v172
    %v174 = vpop.f32.mrb[0].mxu0
    %175 = vmatprep.mubr.f32.mxu0 0.0
    %176 = vmatmul.mubr.f32.gmra.mrb[0].mxu0 %v83
    %v177 = vpop.f32.mrb[0].mxu0
    %v178 = vadd.f32 %v46, %v177
    %v179 = vpop.f32.mrb[0].mxu0
    %180 = vmatprep.mubr.f32.mxu0 0.0
    %181 = vmatmul.mubr.f32.gmra.mrb[0].mxu0 %v86
    %v182 = vpop.f32.mrb[0].mxu0
    %v183 = vadd.f32 %v51, %v182
    %v184 = vpop.f32.mrb[0].mxu0
    %185 = vmatprep.mubr.f32.mxu0 0.0
    %186 = vmatmul.mubr.f32.gmra.mrb[0].mxu0 %v89
    %v187 = vpop.f32.mrb[0].mxu0
    %v188 = vadd.f32 %v56, %v187
    %v189 = vpop.f32.mrb[0].mxu0
    %190 = vmatprep.mubr.f32.mxu0 0.0
    %191 = vmatmul.mubr.f32.gmra.mrb[0].mxu0 %v92
    %v192 = vpop.f32.mrb[0].mxu0
    %v193 = vadd.f32 %v61, %v192
    %v194 = vpop.f32.mrb[0].mxu0
    %195 = vmatprep.mubr.f32.mxu0 0.0
    %196 = vmatmul.mubr.f32.gmra.mrb[0].mxu0 %v95
    %v197 = vpop.f32.mrb[0].mxu0
    %v198 = vadd.f32 %v66, %v197
    %v199 = vpop.f32.mrb[0].mxu0
    %200 = vmatprep.mubr.f32.mxu0 0.0
    %201 = vmatmul.mubr.f32.gmra.mrb[0].mxu0 %v98
    %v202 = vpop.f32.mrb[0].mxu0
    %v203 = vadd.f32 %v71, %v202
    %v204 = vpop.f32.mrb[0].mxu0
    %205 = vmatprep.mubr.f32.mxu0 0.0
    %206 = vmatmul.mubr.f32.gmra.mrb[0].mxu0 %v101
    %v207 = vpop.f32.mrb[0].mxu0
    %v208 = vadd.f32 %v76, %v207
    %v209 = vpop.f32.mrb[0].mxu0
    %210 = vdwg.mxu0
    %v211 = vmax.f32 %v173, 0.0
    %v212 = vmax.f32 %v178, 0.0
    %v213 = vmax.f32 %v183, 0.0
    %v214 = vmax.f32 %v188, 0.0
    %v215 = vmax.f32 %v193, 0.0
    %v216 = vmax.f32 %v198, 0.0
    %v217 = vmax.f32 %v203, 0.0
    %v218 = vmax.f32 %v208, 0.0
    %v219 = vld [vmem:[%s3] sm:$0xff]
    %v220 = vld [vmem:[%s3 + $0x8] sm:$0xff]
    %v221 = vld [vmem:[%s4] sm:$0x1]
    %v223 = vlaneseq
    %v224 = vshrl.u32 %v223, 7
    %v225 = vsub.s32 0, %v224
    %v226 = vrot.slane %v221, %v225
    %228 = vxpose.xlu0.b32.start [1/16] %v211, 128
    %229 = vxpose.xlu0.b32.cont [2/16] %v212, 128
    %230 = vxpose.xlu0.b32.cont [3/16] %v213, 128
    %231 = vxpose.xlu0.b32.cont [4/16] %v214, 128
    %232 = vxpose.xlu0.b32.cont [5/16] %v215, 128
    %233 = vxpose.xlu0.b32.cont [6/16] %v216, 128
    %234 = vxpose.xlu0.b32.cont [7/16] %v217, 128
    %235 = vxpose.xlu0.b32.cont [8/16] %v218, 128
    %236 = vxpose.xlu0.b32.cont [9/16] 0.0, 128
    %237 = vxpose.xlu0.b32.cont [10/16] 0.0, 128
    %238 = vxpose.xlu0.b32.cont [11/16] 0.0, 128
    %239 = vxpose.xlu0.b32.cont [12/16] 0.0, 128
    %240 = vxpose.xlu0.b32.cont [13/16] 0.0, 128
    %241 = vxpose.xlu0.b32.cont [14/16] 0.0, 128
    %242 = vxpose.xlu0.b32.cont [15/16] 0.0, 128
    %243 = vxpose.xlu0.b32.end [16/16] 0.0, 128
    %v244 = vpop.trf.xlu0
    %v245 = vpop.trf.xlu0
    %v246 = vpop.trf.xlu0
    %v247 = vpop.trf.xlu0
    %v248 = vpop.trf.xlu0
    %v249 = vpop.trf.xlu0
    %v250 = vpop.trf.xlu0
    %v251 = vpop.trf.xlu0
    %v252 = vpop.trf.xlu0
    %v253 = vpop.trf.xlu0
    %v254 = vpop.trf.xlu0
    %v255 = vpop.trf.xlu0
    %v256 = vpop.trf.xlu0
    %v257 = vpop.trf.xlu0
    %v258 = vpop.trf.xlu0
    %v259 = vpop.trf.xlu0
    %vm260 = vcmask 523264
    %v262 = vsel %vm260, %v244, 0
    %v265 = vsel %vm260, %v219, 0
    %v268 = vsel %vm260, %v220, 0
    %270 = vmatprep.subr.mxu0 0.0
    %271 = vmatpush1.xpose.msra.mxu0 %v265
    %272 = vmatprep.subr.mxu0 0.0
    %273 = vmatpush1.xpose.msra.mxu0 %v268
    %274 = vmatprep.subr.mxu0 0.0
    %275 = vmatpush1.xpose.msra.mxu0 0.0
    %276 = vmatprep.subr.mxu0 0.0
    %277 = vmatpush1.xpose.msra.mxu0 0.0
    %278 = vmatprep.subr.mxu0 0.0
    %279 = vmatpush1.xpose.msra.mxu0 0.0
    %280 = vmatprep.subr.mxu0 0.0
    %281 = vmatpush1.xpose.msra.mxu0 0.0
    %282 = vmatprep.subr.mxu0 0.0
    %283 = vmatpush1.xpose.msra.mxu0 0.0
    %284 = vmatprep.subr.mxu0 0.0
    %285 = vmatpush1.xpose.msra.mxu0 0.0
    %286 = vmatprep.subr.mxu0 0.0
    %287 = vmatpush1.xpose.msra.mxu0 0.0
    %288 = vmatprep.subr.mxu0 0.0
    %289 = vmatpush1.xpose.msra.mxu0 0.0
    %290 = vmatprep.subr.mxu0 0.0
    %291 = vmatpush1.xpose.msra.mxu0 0.0
    %292 = vmatprep.subr.mxu0 0.0
    %293 = vmatpush1.xpose.msra.mxu0 0.0
    %294 = vmatprep.subr.mxu0 0.0
    %295 = vmatpush1.xpose.msra.mxu0 0.0
    %296 = vmatprep.subr.mxu0 0.0
    %297 = vmatpush1.xpose.msra.mxu0 0.0
    %298 = vmatprep.subr.mxu0 0.0
    %299 = vmatpush1.xpose.msra.mxu0 0.0
    %300 = vmatprep.subr.mxu0 0.0
    %301 = vmatpush1.xpose.msra.mxu0 0.0
    %302 = vmatprep.subr.mxu0 0.0
    %303 = vmatpush1.xpose.msra.mxu0 0.0
    %304 = vmatprep.subr.mxu0 0.0
    %305 = vmatpush1.xpose.msra.mxu0 0.0
    %306 = vmatprep.subr.mxu0 0.0
    %307 = vmatpush1.xpose.msra.mxu0 0.0
    %308 = vmatprep.subr.mxu0 0.0
    %309 = vmatpush1.xpose.msra.mxu0 0.0
    %310 = vmatprep.subr.mxu0 0.0
    %311 = vmatpush1.xpose.msra.mxu0 0.0
    %312 = vmatprep.subr.mxu0 0.0
    %313 = vmatpush1.xpose.msra.mxu0 0.0
    %314 = vmatprep.subr.mxu0 0.0
    %315 = vmatpush1.xpose.msra.mxu0 0.0
    %316 = vmatprep.subr.mxu0 0.0
    %317 = vmatpush1.xpose.msra.mxu0 0.0
    %318 = vmatprep.subr.mxu0 0.0
    %319 = vmatpush1.xpose.msra.mxu0 0.0
    %320 = vmatprep.subr.mxu0 0.0
    %321 = vmatpush1.xpose.msra.mxu0 0.0
    %322 = vmatprep.subr.mxu0 0.0
    %323 = vmatpush1.xpose.msra.mxu0 0.0
    %324 = vmatprep.subr.mxu0 0.0
    %325 = vmatpush1.xpose.msra.mxu0 0.0
    %326 = vmatprep.subr.mxu0 0.0
    %327 = vmatpush1.xpose.msra.mxu0 0.0
    %328 = vmatprep.subr.mxu0 0.0
    %329 = vmatpush1.xpose.msra.mxu0 0.0
    %330 = vmatprep.subr.mxu0 0.0
    %331 = vmatpush1.xpose.msra.mxu0 0.0
    %332 = vmatprep.subr.mxu0 0.0
    %333 = vmatpush1.xpose.msra.mxu0 0.0
    %334 = vmatprep.mubr.f32.mxu0 0.0
    %335 = vmatmul.mubr.f32.gmra.mrb[0].mxu0 %v262
    %v336 = vpop.f32.mrb[0].mxu0
    %v337 = vadd.f32 %v226, %v336
    %v338 = vpop.f32.mrb[0].mxu0
    %339 = vdwg.mxu0
    %vm340 = vcmask 130048
    %341 = vst.msk [vmem:[#allocation2] sm:$0xff] %vm340, %v337
    // Predicated region
    $region22: #{tpu_custom_call.1} parent=1 // pred_check
      _
    $region23: #{tpu_custom_call.1} parent=1 // pred_check_branch
      %343 = sbr.rel (0) target = $region25
    $region24: #{tpu_custom_call.1} parent=1 // pred_region
      %s345 = ssub.s32 128, 128
      %346 = vsyncadd [#allocation3], %s345
      %s348 = sshll.u32 [#allocation2], 4
      %s349 = int_to_ptr.vmem [resolvable:$true] %s348
      %351 = dma.vmem_to_hbm [thread:$0]  %s349, 128, %s5, [#allocation3]
    $region25: #{tpu_custom_call.1} parent=1 // pred_fallthru
      _
    // Predicated region
    $region26: #{tpu_custom_call.1} parent=1 // pred_check
      _
    $region27: #{tpu_custom_call.1} parent=1 // pred_check_branch
      %353 = sbr.rel (0) target = $region29
    $region28: #{tpu_custom_call.1} parent=1 // pred_region
      %354 = dma.done [#allocation3], 128
    $region29: #{tpu_custom_call.1} parent=1 // pred_fallthru
      _
    %355 = vsyncpa [#allocation3], 1

</llo_original>
